<compile_context>
chip_gen: v7x
topology: tpu7x:2x2x1
jax: 0.10.0
libtpu: 0.0.40
codegen_flags: <defaults>
</compile_context>

<pallas_src>
import functools

import jax
import jax.numpy as jnp
from jax import lax
from jax.experimental import pallas as pl
from jax.experimental.pallas import tpu as pltpu


def _dice_partials_kernel(logits_ref, labels_ref, inter_ref, card_ref,
                          acc_inter, acc_card, *, hw, tiles_per_split):
    n = pl.program_id(1)
    t = pl.program_id(2)
    first = jnp.logical_and(n == 0, t == 0)
    last = jnp.logical_and(n == pl.num_programs(1) - 1,
                           t == pl.num_programs(2) - 1)

    @pl.when(first)
    def _init():
        acc_inter[...] = jnp.zeros_like(acc_inter)
        acc_card[...] = jnp.zeros_like(acc_card)

    x = logits_ref[0].astype(jnp.float32)             # (C, tile_hw)
    lbl = labels_ref[0]                               # (1, tile_hw) int32
    C, tile_hw = x.shape

    # Global pixel offsets for this (split, tile); mask lanes past H*W so padded /
    # clamped blocks contribute nothing (to intersection AND cardinality).
    s = pl.program_id(0)
    start = (s * tiles_per_split + t) * tile_hw       # scalar int32
    lane = lax.broadcasted_iota(jnp.int32, (1, tile_hw), 1)
    valid = (start + lane) < hw                       # (1, tile_hw) bool
    valid_f = valid.astype(jnp.float32)

    # Guard against garbage in out-of-range lanes before the exp.
    x = jnp.where(valid, x, 0.0)

    # Softmax over the channel (sublane) axis; denominator via EUP vrcp.
    m = jnp.max(x, axis=0, keepdims=True)
    e = jnp.exp(x - m)
    inv = pl.reciprocal(jnp.sum(e, axis=0, keepdims=True), approx=True)
    probas = e * inv                                  # (C, tile_hw)

    classes = lax.broadcasted_iota(jnp.int32, (C, 1), 0)
    one_hot = jnp.logical_and(lbl == classes, valid).astype(jnp.float32)

    # Lane-wise partial sums (pure VPU adds); cross-lane reduce deferred.
    acc_inter[...] += probas * one_hot
    acc_card[...] += probas * valid_f + one_hot

    @pl.when(last)
    def _finalize():
        inter_ref[...] = jnp.sum(acc_inter[...], axis=-1, keepdims=True)[None]
        card_ref[...] = jnp.sum(acc_card[...], axis=-1, keepdims=True)[None]


def dice_loss(logits, true, eps=1e-07, tile_hw=8192, num_splits=2):
    """logits: [N, C, H, W] float; true: [N, 1, H, W] int labels in [0, C)."""
    N, C, H, W = logits.shape
    HW = H * W

    # Free reshapes only — no transpose / extra HBM pass.
    logits_f = logits.reshape(N, C, HW)
    labels_f = true.astype(jnp.int32).reshape(N, 1, HW)
    # TODO(synk): accept int8/int16 labels end-to-end to shave label HBM traffic.

    # Pick the pixel (lane) tile: multiple of 128, capped so a logits block
    # stays ~2 MiB (fits easily in scoped VMEM on all generations), or the full
    # HW if it is small.
    cap = max(128, (2 * 1024 * 1024 // (C * 4)) // 128 * 128)
    tile_hw = min(tile_hw, cap)
    if HW <= tile_hw:
        tile_hw = HW
    else:
        tile_hw = max(128, (tile_hw // 128) * 128)

    n_tiles = pl.cdiv(HW, tile_hw)                    # total pixel tiles
    n_splits = max(1, min(num_splits, n_tiles))       # parallel splits (v7x: 2 TCs)
    tiles_per_split = pl.cdiv(n_tiles, n_splits)
    last_block = n_tiles - 1

    def in_map(s, n, t):
        # Clamp to the last real block; out-of-range tiles are fully masked
        # in-kernel so re-reading a valid block is harmless.
        return (n, 0, jnp.minimum(s * tiles_per_split + t, last_block))

    out_map = lambda s, n, t: (s, 0, 0)

    kernel = functools.partial(_dice_partials_kernel,
                               hw=HW, tiles_per_split=tiles_per_split)

    inter, card = pl.pallas_call(
        kernel,
        out_shape=(jax.ShapeDtypeStruct((n_splits, C, 1), jnp.float32),
                   jax.ShapeDtypeStruct((n_splits, C, 1), jnp.float32)),
        grid_spec=pltpu.PrefetchScalarGridSpec(
            num_scalar_prefetch=0,
            grid=(n_splits, N, tiles_per_split),
            in_specs=[
                pl.BlockSpec((1, C, tile_hw), in_map),   # logits tile
                pl.BlockSpec((1, 1, tile_hw), in_map),   # labels tile
            ],
            out_specs=[
                pl.BlockSpec((1, C, 1), out_map),        # per-split intersection
                pl.BlockSpec((1, C, 1), out_map),        # per-split cardinality
            ],
            scratch_shapes=[
                pltpu.VMEM((C, tile_hw), jnp.float32),   # lane-wise intersection acc
                pltpu.VMEM((C, tile_hw), jnp.float32),   # lane-wise cardinality acc
            ],
        ),
        compiler_params=pltpu.CompilerParams(
            dimension_semantics=("parallel", "arbitrary", "arbitrary")),
    )(logits_f, labels_f)

    # Combine per-split partials and finish the dice mean (tiny, done in XLA).
    inter = jnp.sum(inter[:, :, 0], axis=0)           # (C,)
    card = jnp.sum(card[:, :, 0], axis=0)             # (C,)
    dice = 2.0 * inter / (card + eps)
    return 1.0 - jnp.mean(dice)


def dice_loss_ref(logits, true, eps=1e-07):
    """Pure-JAX reference mirroring the PyTorch module."""
    C = logits.shape[1]
    labels = true.reshape(true.shape[0], *true.shape[2:])          # squeeze(1)
    one_hot = jax.nn.one_hot(labels, C, dtype=logits.dtype)        # [N,H,W,C]
    one_hot = jnp.transpose(one_hot, (0, 3, 1, 2))                 # [N,C,H,W]
    probas = jax.nn.softmax(logits, axis=1)
    dims = (0, 2, 3)
    intersection = jnp.sum(probas * one_hot, axis=dims)
    cardinality = jnp.sum(probas + one_hot, axis=dims)
    return 1.0 - jnp.mean(2.0 * intersection / (cardinality + eps))


if __name__ == "__main__":
    key = jax.random.PRNGKey(0)
    k_logits, k_labels = jax.random.split(key)

    N, C, H, W = 2, 4, 16, 16
    logits = jax.random.normal(k_logits, (N, C, H, W), dtype=jnp.float32)
    true = jax.random.randint(k_labels, (N, 1, H, W), 0, C, dtype=jnp.int32)

    out = dice_loss(logits, true)
    out = jax.block_until_ready(out)

    ref = dice_loss_ref(logits, true)
    # Slightly relaxed tolerance: pl.reciprocal(approx=True) perturbs the softmax
    # denominator at the ~1e-5 level.
    assert jnp.allclose(out, ref, atol=1e-4, rtol=1e-4), (out, ref)

    print("KERNEL_OK")
</pallas_src>

<mosaic_0001>
module attributes {stable_mosaic.version = 11 : i64} {
  func.func @_dice_partials_kernel(%arg0: i32, %arg1: i32, %arg2: i32, %arg3: memref<1x4x256xf32, #tpu.memory_space<vmem>>, %arg4: memref<1x1x256xi32, #tpu.memory_space<vmem>>, %arg5: memref<1x4x1xf32, #tpu.memory_space<vmem>>, %arg6: memref<1x4x1xf32, #tpu.memory_space<vmem>>, %arg7: memref<4x256xf32, #tpu.memory_space<vmem>>, %arg8: memref<4x256xf32, #tpu.memory_space<vmem>>) attributes {dimension_semantics = [#tpu.dimension_semantics<parallel>, #tpu.dimension_semantics<arbitrary>, #tpu.dimension_semantics<arbitrary>], iteration_bounds = array<i64: 1, 2, 1>, scalar_prefetch = 0 : i64, scratch_operands = 2 : i64, tpu.core_type = #tpu.core_type<tc>, window_params = [{transform_indices = @transform_0, window_bounds = array<i64: 1, 4, 256>}, {transform_indices = @transform_1, window_bounds = array<i64: 1, 1, 256>}, {transform_indices = @transform_2, window_bounds = array<i64: 1, 4, 1>}, {transform_indices = @transform_3, window_bounds = array<i64: 1, 4, 1>}]} {
    %c0_i32 = arith.constant 0 : i32
    %0 = arith.cmpi eq, %arg1, %c0_i32 : i32
    %c0_i32_0 = arith.constant 0 : i32
    %1 = arith.cmpi eq, %arg2, %c0_i32_0 : i32
    %2 = arith.andi %0, %1 : i1
    %c1_i32 = arith.constant 1 : i32
    %3 = arith.cmpi eq, %arg1, %c1_i32 : i32
    %c0_i32_1 = arith.constant 0 : i32
    %4 = arith.cmpi eq, %arg2, %c0_i32_1 : i32
    %5 = arith.andi %3, %4 : i1
    %6 = arith.extui %2 : i1 to i32
    %c0_i32_2 = arith.constant 0 : i32
    %7 = arith.cmpi ne, %6, %c0_i32_2 : i32
    scf.if %7 {
      %cst_21 = arith.constant 0.000000e+00 : f32
      %56 = vector.broadcast %cst_21 : f32 to vector<4x256xf32>
      %c0_22 = arith.constant 0 : index
      %c0_23 = arith.constant 0 : index
      %57 = vector.load %arg7[%c0_22, %c0_23] : memref<4x256xf32, #tpu.memory_space<vmem>>, vector<4x256xf32>
      tpu.vector_store %arg7[%c0_22, %c0_23], %56 {strides = array<i32>} : memref<4x256xf32, #tpu.memory_space<vmem>>, vector<4x256xf32>,
      %cst_24 = arith.constant 0.000000e+00 : f32
      %58 = vector.broadcast %cst_24 : f32 to vector<4x256xf32>
      %c0_25 = arith.constant 0 : index
      %c0_26 = arith.constant 0 : index
      %59 = vector.load %arg8[%c0_25, %c0_26] : memref<4x256xf32, #tpu.memory_space<vmem>>, vector<4x256xf32>
      tpu.vector_store %arg8[%c0_25, %c0_26], %58 {strides = array<i32>} : memref<4x256xf32, #tpu.memory_space<vmem>>, vector<4x256xf32>,
    } else {
    }
    %c0 = arith.constant 0 : index
    %c0_3 = arith.constant 0 : index
    %c0_4 = arith.constant 0 : index
    %8 = vector.load %arg3[%c0, %c0_3, %c0_4] : memref<1x4x256xf32, #tpu.memory_space<vmem>>, vector<1x4x256xf32>
    %9 = vector.shape_cast %8 : vector<1x4x256xf32> to vector<4x256xf32>
    %c0_5 = arith.constant 0 : index
    %c0_6 = arith.constant 0 : index
    %c0_7 = arith.constant 0 : index
    %10 = vector.load %arg4[%c0_5, %c0_6, %c0_7] : memref<1x1x256xi32, #tpu.memory_space<vmem>>, vector<1x1x256xi32>
    %11 = vector.shape_cast %10 : vector<1x1x256xi32> to vector<1x256xi32>
    %c1_i32_8 = arith.constant 1 : i32
    %12 = arith.muli %arg0, %c1_i32_8 : i32
    %13 = arith.addi %12, %arg2 : i32
    %c256_i32 = arith.constant 256 : i32
    %14 = arith.muli %13, %c256_i32 : i32
    %15 = tpu.iota {dimensions = array<i32: 1>} : vector<1x256xi32>
    %16 = vector.broadcast %14 : i32 to vector<1x256xi32>
    %17 = arith.addi %16, %15 : vector<1x256xi32>
    %c256_i32_9 = arith.constant 256 : i32
    %18 = vector.broadcast %c256_i32_9 : i32 to vector<1x256xi32>
    %19 = arith.cmpi slt, %17, %18 : vector<1x256xi32>
    %20 = arith.extui %19 : vector<1x256xi1> to vector<1x256xi32>
    %21 = arith.sitofp %20 : vector<1x256xi32> to vector<1x256xf32>
    %cst = arith.constant 0.000000e+00 : f32
    %22 = vector.shape_cast %19 : vector<1x256xi1> to vector<1x256xi1>
    %23 = vector.broadcast %22 : vector<1x256xi1> to vector<4x256xi1>
    %24 = vector.broadcast %cst : f32 to vector<4x256xf32>
    %25 = arith.select %23, %9, %24 : vector<4x256xi1>, vector<4x256xf32>
    %cst_10 = arith.constant dense<0xFF800000> : vector<256xf32>
    %26 = vector.multi_reduction <maximumf>, %25, %cst_10 [0] : vector<4x256xf32> to vector<256xf32>
    %27 = vector.shape_cast %26 : vector<256xf32> to vector<1x256xf32>
    %28 = vector.broadcast %27 : vector<1x256xf32> to vector<4x256xf32>
    %29 = arith.subf %25, %28 : vector<4x256xf32>
    %30 = math.exp %29 : vector<4x256xf32>
    %cst_11 = arith.constant dense<0.000000e+00> : vector<256xf32>
    %31 = vector.multi_reduction <add>, %30, %cst_11 [0] : vector<4x256xf32> to vector<256xf32>
    %32 = vector.shape_cast %31 : vector<256xf32> to vector<1x256xf32>
    %33 = tpu.reciprocal %32 {approx = true} : vector<1x256xf32> -> vector<1x256xf32>
    %34 = vector.broadcast %33 : vector<1x256xf32> to vector<4x256xf32>
    %35 = arith.mulf %30, %34 : vector<4x256xf32>
    %36 = tpu.iota {dimensions = array<i32: 0>} : vector<4x1xi32>
    %37 = vector.broadcast %11 : vector<1x256xi32> to vector<4x256xi32>
    %38 = vector.broadcast %36 : vector<4x1xi32> to vector<4x256xi32>
    %39 = arith.cmpi eq, %37, %38 : vector<4x256xi32>
    %40 = vector.broadcast %19 : vector<1x256xi1> to vector<4x256xi1>
    %41 = arith.andi %39, %40 : vector<4x256xi1>
    %42 = arith.extui %41 : vector<4x256xi1> to vector<4x256xi32>
    %43 = arith.sitofp %42 : vector<4x256xi32> to vector<4x256xf32>
    %c0_12 = arith.constant 0 : index
    %c0_13 = arith.constant 0 : index
    %44 = vector.load %arg7[%c0_12, %c0_13] : memref<4x256xf32, #tpu.memory_space<vmem>>, vector<4x256xf32>
    %45 = arith.mulf %35, %43 : vector<4x256xf32>
    %46 = arith.addf %44, %45 : vector<4x256xf32>
    %c0_14 = arith.constant 0 : index
    %c0_15 = arith.constant 0 : index
    %47 = vector.load %arg7[%c0_14, %c0_15] : memref<4x256xf32, #tpu.memory_space<vmem>>, vector<4x256xf32>
    tpu.vector_store %arg7[%c0_14, %c0_15], %46 {strides = array<i32>} : memref<4x256xf32, #tpu.memory_space<vmem>>, vector<4x256xf32>,
    %c0_16 = arith.constant 0 : index
    %c0_17 = arith.constant 0 : index
    %48 = vector.load %arg8[%c0_16, %c0_17] : memref<4x256xf32, #tpu.memory_space<vmem>>, vector<4x256xf32>
    %49 = vector.broadcast %21 : vector<1x256xf32> to vector<4x256xf32>
    %50 = arith.mulf %35, %49 : vector<4x256xf32>
    %51 = arith.addf %50, %43 : vector<4x256xf32>
    %52 = arith.addf %48, %51 : vector<4x256xf32>
    %c0_18 = arith.constant 0 : index
    %c0_19 = arith.constant 0 : index
    %53 = vector.load %arg8[%c0_18, %c0_19] : memref<4x256xf32, #tpu.memory_space<vmem>>, vector<4x256xf32>
    tpu.vector_store %arg8[%c0_18, %c0_19], %52 {strides = array<i32>} : memref<4x256xf32, #tpu.memory_space<vmem>>, vector<4x256xf32>,
    %54 = arith.extui %5 : i1 to i32
    %c0_i32_20 = arith.constant 0 : i32
    %55 = arith.cmpi ne, %54, %c0_i32_20 : i32
    scf.if %55 {
      %c0_21 = arith.constant 0 : index
      %c0_22 = arith.constant 0 : index
      %56 = vector.load %arg7[%c0_21, %c0_22] : memref<4x256xf32, #tpu.memory_space<vmem>>, vector<4x256xf32>
      %cst_23 = arith.constant dense<0.000000e+00> : vector<4xf32>
      %57 = vector.multi_reduction <add>, %56, %cst_23 [1] : vector<4x256xf32> to vector<4xf32>
      %58 = vector.shape_cast %57 : vector<4xf32> to vector<4x1xf32>
      %59 = vector.shape_cast %58 : vector<4x1xf32> to vector<1x4x1xf32>
      %c0_24 = arith.constant 0 : index
      %c0_25 = arith.constant 0 : index
      %c0_26 = arith.constant 0 : index
      %60 = vector.load %arg5[%c0_24, %c0_25, %c0_26] : memref<1x4x1xf32, #tpu.memory_space<vmem>>, vector<1x4x1xf32>
      tpu.vector_store %arg5[%c0_24, %c0_25, %c0_26], %59 {strides = array<i32>} : memref<1x4x1xf32, #tpu.memory_space<vmem>>, vector<1x4x1xf32>,
      %c0_27 = arith.constant 0 : index
      %c0_28 = arith.constant 0 : index
      %61 = vector.load %arg8[%c0_27, %c0_28] : memref<4x256xf32, #tpu.memory_space<vmem>>, vector<4x256xf32>
      %cst_29 = arith.constant dense<0.000000e+00> : vector<4xf32>
      %62 = vector.multi_reduction <add>, %61, %cst_29 [1] : vector<4x256xf32> to vector<4xf32>
      %63 = vector.shape_cast %62 : vector<4xf32> to vector<4x1xf32>
      %64 = vector.shape_cast %63 : vector<4x1xf32> to vector<1x4x1xf32>
      %c0_30 = arith.constant 0 : index
      %c0_31 = arith.constant 0 : index
      %c0_32 = arith.constant 0 : index
      %65 = vector.load %arg6[%c0_30, %c0_31, %c0_32] : memref<1x4x1xf32, #tpu.memory_space<vmem>>, vector<1x4x1xf32>
      tpu.vector_store %arg6[%c0_30, %c0_31, %c0_32], %64 {strides = array<i32>} : memref<1x4x1xf32, #tpu.memory_space<vmem>>, vector<1x4x1xf32>,
    } else {
    }
    return
  }
  func.func @transform_0(%arg0: i32, %arg1: i32, %arg2: i32) -> (i32, i32, i32) {
    %c1_i32 = arith.constant 1 : i32
    %0 = arith.muli %arg0, %c1_i32 : i32
    %1 = arith.addi %0, %arg2 : i32
    %c0_i32 = arith.constant 0 : i32
    %2 = arith.minsi %1, %c0_i32 : i32
    %c0_i32_0 = arith.constant 0 : i32
    %c0_i32_1 = arith.constant 0 : i32
    return %arg1, %c0_i32_0, %2 : i32, i32, i32
  }
  func.func @transform_1(%arg0: i32, %arg1: i32, %arg2: i32) -> (i32, i32, i32) {
    %c1_i32 = arith.constant 1 : i32
    %0 = arith.muli %arg0, %c1_i32 : i32
    %1 = arith.addi %0, %arg2 : i32
    %c0_i32 = arith.constant 0 : i32
    %2 = arith.minsi %1, %c0_i32 : i32
    %c0_i32_0 = arith.constant 0 : i32
    %c0_i32_1 = arith.constant 0 : i32
    return %arg1, %c0_i32_0, %2 : i32, i32, i32
  }
  func.func @transform_2(%arg0: i32, %arg1: i32, %arg2: i32) -> (i32, i32, i32) {
    %c0_i32 = arith.constant 0 : i32
    %c0_i32_0 = arith.constant 0 : i32
    %c0_i32_1 = arith.constant 0 : i32
    return %arg0, %c0_i32, %c0_i32_0 : i32, i32, i32
  }
  func.func @transform_3(%arg0: i32, %arg1: i32, %arg2: i32) -> (i32, i32, i32) {
    %c0_i32 = arith.constant 0 : i32
    %c0_i32_0 = arith.constant 0 : i32
    %c0_i32_1 = arith.constant 0 : i32
    return %arg0, %c0_i32, %c0_i32_0 : i32, i32, i32
  }
}

</mosaic_0001>

<llo_original>
// kernel: tpu_custom_call.1
$region0: #{tpu_custom_call.1}
  #allocation0 [shape = 'u32[]', space=smem, size = 0x4, offset = 0x4, fixed_abs, tag = 'smem constant byte address 0x4 - core index']
  #allocation1 [shape = 'u32[144,128]{1,0:T(1,128)}', space=vmem, size = 0x12000, scoped, tag = 'internal scratch']
  #allocation2 [shape = 'f32[4,256]{1,0:T(4,128)}', space=vmem, size = 0x1000, scoped, tag = 'scratch operand']
  #allocation3 [shape = 'f32[4,256]{1,0:T(4,128)}', space=vmem, size = 0x1000, scoped, tag = 'scratch operand']
  %s0 = inlined_call_operand.hbm [shape: f32[2,4,256], index: 0, kind: input, shape index: {}]
  %s1 = inlined_call_operand.hbm [shape: s32[2,1,256], index: 1, kind: input, shape index: {}]
  %s2 = inlined_call_operand.vmem [shape: f32[1,4,1], index: 2, kind: output, shape index: {0}]
  %s3 = inlined_call_operand.vmem [shape: f32[1,4,1], index: 3, kind: output, shape index: {1}]
  %4 = xla_tuple %s2, %s3
  %s5 = sld [smem:[#allocation0]]
  $region65: #{tpu_custom_call.1} parent=0
    _
  %s7 = ssub.s32 1, %s5
  %s8 = scalar_select 0, %s7, %s5
  $region1: #{tpu_custom_call.1} parent=0
    #allocation4 [shape = 'u8[8192]{0}', space=vmem, size = 0x2000, scoped, tag = 'input window, operand 0']
    #allocation5 [shape = 's32[2]{0}', space=sflag, size = 0x8, scoped, tag = 'scoped memory for tpu_custom_call.1']
    #allocation6 [shape = 'u8[2048]{0}', space=vmem, size = 0x800, scoped, tag = 'input window, operand 1']
    #allocation7 [shape = 's32[2]{0}', space=sflag, size = 0x8, scoped, tag = 'scoped memory for tpu_custom_call.1']
    %9 = vsyncpa [#allocation5], 0
    %s10 = scalar_lea.sflag [#allocation5], 1
    %11 = vsyncpa %s10, 0
    %12 = vsyncpa [#allocation7], 0
    %s13 = scalar_lea.sflag [#allocation7], 1
    %14 = vsyncpa %s13, 0
    loop: start=0, step=1, limit=4
    $region2: #{tpu_custom_call.1} parent=1 // loop_pre_header
      _
    $region3: #{tpu_custom_call.1} parent=1 // loop_header
      %s16 = sphi 0, %s20
      %p17 = scmp.ge.s32.totalorder %s16, 4
      %s23 = sphi 0, %s42
      %s24 = sphi 0, %s38
      %s25 = sphi 0, %s34
      %s26 = sphi 0, %s23
      %s27 = sphi 0, %s24
      %s28 = sphi 0, %s25
      %s29 = sphi 0, %s26
      %s30 = sphi 0, %s27
      %s31 = sphi 0, %s28
      %s53 = sphi 0, %s55
      %s56 = sphi 0, %s53
      %s57 = sphi 0, %s56
      %s73 = sphi 0, %s57
      %s87 = sphi 0, %s89
      %s90 = sphi 0, %s87
      %s91 = sphi 0, %s90
      %s107 = sphi 0, %s91
      %s113 = sphi 0, %s115
      %s116 = sphi 0, %s113
      %s117 = sphi 0, %s116
      %s133 = sphi 0, %s117
      %s139 = sphi 0, %s141
      %s142 = sphi 0, %s139
      %s143 = sphi 0, %s142
      %s159 = sphi 0, %s143
    $region4: #{tpu_custom_call.1} parent=1 // loop_header_branch
      %19 = sbr.rel (%p17) target = $region8
    $region5: #{tpu_custom_call.1} parent=1 // loop_body
      %s21 = ssub.s32 %s16, 1
      %s22 = ssub.s32 %s16, 2
      %s32 = sadd.s32 1, %s25
      %p33 = scmp.ge.s32.totalorder %s32, 1
      %s34 = scalar_select %p33, 0, %s32
      %s35 = sadd.s32 1, %s24
      %s36 = scalar_select %p33, %s35, %s24
      %p37 = scmp.ge.s32.totalorder %s36, 2
      %s38 = scalar_select %p37, 0, %s36
      %s39 = sadd.s32 1, %s23
      %s40 = scalar_select %p37, %s39, %s23
      %p41 = scmp.ge.s32.totalorder %s40, 1
      %s42 = scalar_select %p41, 0, %s40
      %s43 = sadd.s32 %s23, %s25
      %p44 = scmp.lt.s32.totalorder %s43, 0
      %s45 = scalar_select %p44, %s43, 0
      %s46 = sadd.s32 %s42, %s34
      %p47 = scmp.lt.s32.totalorder %s46, 0
      %s48 = scalar_select %p47, %s46, 0
      %s49 = ssub.s32 %s24, %s38
      %s50 = ssub.s32 %s45, %s48
      %s51 = sor.u32 %s49, %s50
      %p52 = scmp.eq.s32.totalorder %s51, 0
      %s54 = sadd.s32 %s53, 1
      %s55 = scalar_select %p52, %s53, %s54
      %p58 = pneg %p52
      %p59 = scmp.eq.s32.totalorder %s16, 1
      %p60 = por %p58, %p59
      %p61 = scmp.ne.s32.totalorder %s53, %s56
      %p62 = scmp.eq.s32.totalorder %s16, 0
      %p63 = por %p61, %p62
      %p64 = scmp.ne.s32.totalorder %s53, %s56
      %p65 = scmp.eq.s32.totalorder %s21, 1
      %p66 = por %p64, %p65
      %p67 = scmp.ne.s32.totalorder %s56, %s57
      %p68 = scmp.eq.s32.totalorder %s21, 0
      %p69 = por %p67, %p68
      %p70 = scmp.ne.s32.totalorder %s56, %s57
      %p71 = scmp.eq.s32.totalorder %s22, 1
      %p72 = por %p70, %p71
      %p74 = scmp.ne.s32.totalorder %s57, %s73
      %p75 = scmp.eq.s32.totalorder %s22, 0
      %p76 = por %p74, %p75
      %s77 = sadd.s32 %s23, %s25
      %p78 = scmp.lt.s32.totalorder %s77, 0
      %s79 = scalar_select %p78, %s77, 0
      %s80 = sadd.s32 %s42, %s34
      %p81 = scmp.lt.s32.totalorder %s80, 0
      %s82 = scalar_select %p81, %s80, 0
      %s83 = ssub.s32 %s24, %s38
      %s84 = ssub.s32 %s79, %s82
      %s85 = sor.u32 %s83, %s84
      %p86 = scmp.eq.s32.totalorder %s85, 0
      %s88 = sadd.s32 %s87, 1
      %s89 = scalar_select %p86, %s87, %s88
      %p92 = pneg %p86
      %p93 = scmp.eq.s32.totalorder %s16, 1
      %p94 = por %p92, %p93
      %p95 = scmp.ne.s32.totalorder %s87, %s90
      %p96 = scmp.eq.s32.totalorder %s16, 0
      %p97 = por %p95, %p96
      %p98 = scmp.ne.s32.totalorder %s87, %s90
      %p99 = scmp.eq.s32.totalorder %s21, 1
      %p100 = por %p98, %p99
      %p101 = scmp.ne.s32.totalorder %s90, %s91
      %p102 = scmp.eq.s32.totalorder %s21, 0
      %p103 = por %p101, %p102
      %p104 = scmp.ne.s32.totalorder %s90, %s91
      %p105 = scmp.eq.s32.totalorder %s22, 1
      %p106 = por %p104, %p105
      %p108 = scmp.ne.s32.totalorder %s91, %s107
      %p109 = scmp.eq.s32.totalorder %s22, 0
      %p110 = por %p108, %p109
      %s111 = ssub.s32 %s23, %s42
      %p112 = scmp.eq.s32.totalorder %s111, 0
      %s114 = sadd.s32 %s113, 1
      %s115 = scalar_select %p112, %s113, %s114
      %p118 = pneg %p112
      %p119 = scmp.eq.s32.totalorder %s16, 1
      %p120 = por %p118, %p119
      %p121 = scmp.ne.s32.totalorder %s113, %s116
      %p122 = scmp.eq.s32.totalorder %s16, 0
      %p123 = por %p121, %p122
      %p124 = scmp.ne.s32.totalorder %s113, %s116
      %p125 = scmp.eq.s32.totalorder %s21, 1
      %p126 = por %p124, %p125
      %p127 = scmp.ne.s32.totalorder %s116, %s117
      %p128 = scmp.eq.s32.totalorder %s21, 0
      %p129 = por %p127, %p128
      %p130 = scmp.ne.s32.totalorder %s116, %s117
      %p131 = scmp.eq.s32.totalorder %s22, 1
      %p132 = por %p130, %p131
      %p134 = scmp.ne.s32.totalorder %s117, %s133
      %p135 = scmp.eq.s32.totalorder %s22, 0
      %p136 = por %p134, %p135
      %s137 = ssub.s32 %s23, %s42
      %p138 = scmp.eq.s32.totalorder %s137, 0
      %s140 = sadd.s32 %s139, 1
      %s141 = scalar_select %p138, %s139, %s140
      %p144 = pneg %p138
      %p145 = scmp.eq.s32.totalorder %s16, 1
      %p146 = por %p144, %p145
      %p147 = scmp.ne.s32.totalorder %s139, %s142
      %p148 = scmp.eq.s32.totalorder %s16, 0
      %p149 = por %p147, %p148
      %p150 = scmp.ne.s32.totalorder %s139, %s142
      %p151 = scmp.eq.s32.totalorder %s21, 1
      %p152 = por %p150, %p151
      %p153 = scmp.ne.s32.totalorder %s142, %s143
      %p154 = scmp.eq.s32.totalorder %s21, 0
      %p155 = por %p153, %p154
      %p156 = scmp.ne.s32.totalorder %s142, %s143
      %p157 = scmp.eq.s32.totalorder %s22, 1
      %p158 = por %p156, %p157
      %p160 = scmp.ne.s32.totalorder %s143, %s159
      %p161 = scmp.eq.s32.totalorder %s22, 0
      %p162 = por %p160, %p161
      %p163 = scmp.le.s32.totalorder 1, %s16
      %p164 = scmp.lt.s32.totalorder %s16, 3
      %p165 = pnand %p163, %p164
      %p166 = pneg %p165
      // Predicated region
      $region9: #{tpu_custom_call.1} parent=5 // pred_check
        _
      $region10: #{tpu_custom_call.1} parent=5 // pred_check_branch
        %168 = sbr.rel (%p165) target = $region12
      $region11: #{tpu_custom_call.1} parent=5 // pred_region
        %s169 = ssub.s32 %s16, 1
      $region12: #{tpu_custom_call.1} parent=5 // pred_fallthru
        _
      %p170 = scmp.lt.s32.totalorder %s16, 2
      // Predicated region
      $region13: #{tpu_custom_call.1} parent=5 // pred_check
        %p171 = pneg %p170
      $region14: #{tpu_custom_call.1} parent=5 // pred_check_branch
        %173 = sbr.rel (%p171) target = $region16
      $region15: #{tpu_custom_call.1} parent=5 // pred_region
        // Predicated region
        $region17: #{tpu_custom_call.1} parent=15 // pred_check
          %p174 = pneg %p63
        $region18: #{tpu_custom_call.1} parent=15 // pred_check_branch
          %176 = sbr.rel (%p174) target = $region20
        $region19: #{tpu_custom_call.1} parent=15 // pred_region
          %s177 = sand.u32 %s53, 1
          %s178 = scalar_lea.sflag [#allocation5], %s177
          %s179 = sand.u32 %s53, 1
          %s180 = smul.addr %s179, 8
          %s181 = scalar_lea.vmem [#allocation4], %s180
          %s182 = sadd.s32 %s23, %s25
          %p183 = scmp.lt.s32.totalorder %s182, 0
          %s184 = scalar_select %p183, %s182, 0
          %s185 = smul.u32 2, %s184
          %s187 = ssub.s32 128, 128
          %188 = vsyncadd %s178, %s187
          %s189 = smul.addr %s24, 2
          %s190 = sadd.s32 %s185, %s189
          %s191 = smul.addr %s190, 64
          %s192 = scalar_lea.hbm %s0, %s191
          %s194 = sshll.u32 %s181, 4
          %s195 = int_to_ptr.vmem [resolvable:$true] %s194
          %197 = dma.hbm_to_vmem [thread:$0]  %s192, 128, %s195, %s178
        $region20: #{tpu_custom_call.1} parent=15 // pred_fallthru
          _
        // Predicated region
        $region21: #{tpu_custom_call.1} parent=15 // pred_check
          %p198 = pneg %p97
        $region22: #{tpu_custom_call.1} parent=15 // pred_check_branch
          %200 = sbr.rel (%p198) target = $region24
        $region23: #{tpu_custom_call.1} parent=15 // pred_region
          %s201 = sand.u32 %s87, 1
          %s202 = scalar_lea.sflag [#allocation7], %s201
          %s203 = sand.u32 %s87, 1
          %s204 = smul.addr %s203, 2
          %s205 = scalar_lea.vmem [#allocation6], %s204
          %s206 = sadd.s32 %s23, %s25
          %p207 = scmp.lt.s32.totalorder %s206, 0
          %s208 = scalar_select %p207, %s206, 0
          %s209 = smul.u32 2, %s208
          %s211 = ssub.s32 32, 32
          %212 = vsyncadd %s202, %s211
          %s213 = smul.addr %s24, 2
          %s214 = sadd.s32 %s209, %s213
          %s215 = smul.addr %s214, 16
          %s216 = scalar_lea.hbm %s1, %s215
          %s218 = sshll.u32 %s205, 4
          %s219 = int_to_ptr.vmem [resolvable:$true] %s218
          %221 = dma.hbm_to_vmem [thread:$0]  %s216, 32, %s219, %s202
        $region24: #{tpu_custom_call.1} parent=15 // pred_fallthru
          _
      $region16: #{tpu_custom_call.1} parent=5 // pred_fallthru
        _
      %p222 = scmp.le.s32.totalorder 1, %s16
      %p223 = scmp.lt.s32.totalorder %s16, 3
      %p224 = pnand %p222, %p223
      %p225 = pneg %p224
      // Predicated region
      $region25: #{tpu_custom_call.1} parent=5 // pred_check
        _
      $region26: #{tpu_custom_call.1} parent=5 // pred_check_branch
        %227 = sbr.rel (%p224) target = $region28
      $region27: #{tpu_custom_call.1} parent=5 // pred_region
        %s228 = ssub.s32 %s16, 1
        %s229 = sand.u32 %s56, 1
        %s230 = scalar_lea.sflag [#allocation5], %s229
        %s231 = sand.u32 %s56, 1
        %s232 = smul.addr %s231, 8
        %s233 = scalar_lea.vmem [#allocation4], %s232
        // Predicated region
        $region29: #{tpu_custom_call.1} parent=27 // pred_check
          %p234 = pneg %p69
        $region30: #{tpu_custom_call.1} parent=27 // pred_check_branch
          %236 = sbr.rel (%p234) target = $region32
        $region31: #{tpu_custom_call.1} parent=27 // pred_region
          %237 = dma.done %s230, 128
        $region32: #{tpu_custom_call.1} parent=27 // pred_fallthru
          _
        %s238 = sand.u32 %s90, 1
        %s239 = scalar_lea.sflag [#allocation7], %s238
        %s240 = sand.u32 %s90, 1
        %s241 = smul.addr %s240, 2
        %s242 = scalar_lea.vmem [#allocation6], %s241
        // Predicated region
        $region33: #{tpu_custom_call.1} parent=27 // pred_check
          %p243 = pneg %p103
        $region34: #{tpu_custom_call.1} parent=27 // pred_check_branch
          %245 = sbr.rel (%p243) target = $region36
        $region35: #{tpu_custom_call.1} parent=27 // pred_region
          %246 = dma.done %s239, 32
        $region36: #{tpu_custom_call.1} parent=27 // pred_fallthru
          _
        %s247 = sand.u32 %s56, 1
        %s248 = scalar_lea.sflag [#allocation5], %s247
        %s249 = sand.u32 %s56, 1
        %s250 = smul.addr %s249, 8
        %s251 = scalar_lea.vmem [#allocation4], %s250
        %p252 = pneg %p69
        %p253 = pneg %p66
        %s254 = sand.u32 %s90, 1
        %s255 = scalar_lea.sflag [#allocation7], %s254
        %s256 = sand.u32 %s90, 1
        %s257 = smul.addr %s256, 2
        %s258 = scalar_lea.vmem [#allocation6], %s257
        %p259 = pneg %p103
        %p260 = pneg %p100
        %p261 = pneg %p129
        %p262 = pneg %p126
        %p263 = scmp.lt.s32.totalorder %s26, 0
        %s264 = scalar_select %p263, %s26, 0
        %s265 = smul.addr %s264, 4
        %s266 = scalar_lea.vmem %s2, %s265
        %p267 = pneg %p155
        %p268 = pneg %p152
        %p269 = scmp.lt.s32.totalorder %s26, 0
        %s270 = scalar_select %p269, %s26, 0
        %s271 = smul.addr %s270, 4
        %s272 = scalar_lea.vmem %s3, %s271
        %s273 = sadd.s32 %s26, %s28
        %p274 = scmp.lt.s32.totalorder %s273, 0
        %s275 = scalar_select %p274, %s273, 0
        %s276 = smul.u32 2, %s275
        %s277 = sadd.s32 %s26, %s28
        %p278 = scmp.lt.s32.totalorder %s277, 0
        %s279 = scalar_select %p278, %s277, 0
        %s280 = smul.u32 2, %s279
        %p281 = scmp.lt.s32.totalorder %s26, 0
        %s282 = scalar_select %p281, %s26, 0
        %s283 = smul.addr %s282, 4
        %s284 = scalar_lea.vmem %s2, %s283
        %p285 = scmp.lt.s32.totalorder %s26, 0
        %s286 = scalar_select %p285, %s26, 0
        %s287 = smul.addr %s286, 4
        %s288 = scalar_lea.vmem %s3, %s287
        %p289 = scmp.eq.s32.totalorder %s27, 0
        %p290 = scmp.eq.s32.totalorder %s28, 0
        %p291 = pnand %p289, %p290
        %p292 = pneg %p291
        %p293 = scmp.eq.s32.totalorder %s27, 1
        %p294 = pnand %p293, %p290
        %p295 = pneg %p294
        // Predicated region
        $region37: #{tpu_custom_call.1} parent=27 // pred_check
          _
        $region38: #{tpu_custom_call.1} parent=27 // pred_check_branch
          %297 = sbr.rel (%p291) target = $region40
        $region39: #{tpu_custom_call.1} parent=27 // pred_region
          %298 = vst [vmem:[#allocation2] sm:$0xff] 0.0
          %299 = vst [vmem:[#allocation3] sm:$0xff] 0.0
        $region40: #{tpu_custom_call.1} parent=27 // pred_fallthru
          _
        %v300 = vld [vmem:[%s233] sm:$0xff]
        %v301 = vld [vmem:[%s242] sm:$0x3]
        %s302 = sadd.s32 %s26, %s28
        %s303 = smul.u32 %s302, 256
        %v304 = vlaneseq
        %v305 = vand.u32 %v304, 127
        %v306 = vadd.s32 %v305, 128
        %v307 = vstv %s303
        %v308 = vadd.s32 %v307, %v305
        %v309 = vadd.s32 %v307, %v306
        %vm310 = vcmp.lt.s32.totalorder %v308, 256
        %vm311 = vcmp.lt.s32.totalorder %v309, 256
        %v312 = vsel %vm310, 1, 0
        %v313 = vsel %vm311, 1, 0
        %v314 = vcvt.s32.f32 %v312
        %v315 = vcvt.s32.f32 %v313
        %vm316 = vcmp.eq.s32.totalorder %v312, 1
        %vm317 = vcmp.eq.s32.totalorder %v313, 1
        %v319 = vcombine.high %v300, %v300
        %v321 = vsel %vm316, %v300, 0.0
        %v322 = vsel %vm317, %v319, 0.0
        %vm323 = vcmask 1043456
        %v324 = vsel %vm323, %v321, -inf
        %v325 = vrot.slane %v324, 4
        %v326 = vmax.f32 %v324, %v325
        %v327 = vrot.slane %v326, 2
        %v328 = vmax.f32 %v326, %v327
        %v329 = vrot.slane %v328, 1
        %v330 = vmax.f32 %v328, %v329
        %v331 = vsel %vm323, %v322, -inf
        %v332 = vrot.slane %v331, 4
        %v333 = vmax.f32 %v331, %v332
        %v334 = vrot.slane %v333, 2
        %v335 = vmax.f32 %v333, %v334
        %v336 = vrot.slane %v335, 1
        %v337 = vmax.f32 %v335, %v336
        %v338 = vsub.f32 %v321, %v330
        %v339 = vsub.f32 %v322, %v337
        %v340 = vmul.f32 %v338, 1.442695
        %v341 = vpow.pop %v340
        %v342 = vmul.f32 %v339, 1.442695
        %v343 = vpow.pop %v342
        %v344 = vsel %vm323, %v341, 0.0
        %v345 = vrot.slane %v344, 4
        %v346 = vadd.f32 %v344, %v345
        %v347 = vrot.slane %v346, 2
        %v348 = vadd.f32 %v346, %v347
        %v349 = vrot.slane %v348, 1
        %v350 = vadd.f32 %v348, %v349
        %v351 = vsel %vm323, %v343, 0.0
        %v352 = vrot.slane %v351, 4
        %v353 = vadd.f32 %v351, %v352
        %v354 = vrot.slane %v353, 2
        %v355 = vadd.f32 %v353, %v354
        %v356 = vrot.slane %v355, 1
        %v357 = vadd.f32 %v355, %v356
        %v358 = vrcp.pop %v350
        %v359 = vrcp.pop %v357
        %v360 = vmul.f32 %v341, %v358
        %v361 = vmul.f32 %v343, %v359
        %v362 = vlaneseq
        %v363 = vshrl.u32 %v362, 7
        %v364 = vlaneseq
        %v365 = vshrl.u32 %v364, 7
        %v366 = vsub.s32 0, %v365
        %v367 = vrot.slane %v301, %v366
        %v368 = vlaneseq
        %v369 = vshrl.u32 %v368, 7
        %v370 = vsub.s32 1, %v369
        %v371 = vrot.slane %v301, %v370
        %vm372 = vcmp.eq.s32.totalorder %v367, %v363
        %vm373 = vcmp.eq.s32.totalorder %v371, %v363
        %vm374 = vmand %vm372, %vm316
        %vm375 = vmand %vm373, %vm317
        %v376 = vsel %vm374, 1, 0
        %v377 = vsel %vm375, 1, 0
        %v378 = vcvt.s32.f32 %v376
        %v379 = vcvt.s32.f32 %v377
        %v380 = vld [vmem:[#allocation2] sm:$0xff]
        %v381 = vmul.f32 %v360, %v378
        %v382 = vmul.f32 %v361, %v379
        %v385 = vcombine.low %v381, %v382
        %v387 = vadd.f32 %v380, %v385
        %388 = vst [vmem:[#allocation2] sm:$0xff] %v387
        %v389 = vld [vmem:[#allocation3] sm:$0xff]
        %v390 = vmul.f32 %v360, %v314
        %v391 = vmul.f32 %v361, %v315
        %v392 = vadd.f32 %v390, %v378
        %v393 = vadd.f32 %v391, %v379
        %v396 = vcombine.low %v392, %v393
        %v398 = vadd.f32 %v389, %v396
        %399 = vst [vmem:[#allocation3] sm:$0xff] %v398
        // Predicated region
        $region41: #{tpu_custom_call.1} parent=27 // pred_check
          _
        $region42: #{tpu_custom_call.1} parent=27 // pred_check_branch
          %401 = sbr.rel (%p294) target = $region44
        $region43: #{tpu_custom_call.1} parent=27 // pred_region
          %v402 = vld [vmem:[#allocation2] sm:$0xff]
          %v404 = vcombine.high %v402, %v402
          %v406 = vsel %vm323, %v402, 0.0
          %v407 = vsel %vm323, %v404, 0.0
          %v408 = vadd.f32 %v406, %v407
          %409 = vadd.xlane.f32.xlu0 %v408
          %v410 = vpop.xlane.xlu0 %409
          %vm411 = vcmask 3072
          %412 = vst.msk [vmem:[%s284] sm:$0xf] %vm411, %v410
          %v413 = vld [vmem:[#allocation3] sm:$0xff]
          %v415 = vcombine.high %v413, %v413
          %v417 = vsel %vm323, %v413, 0.0
          %v418 = vsel %vm323, %v415, 0.0
          %v419 = vadd.f32 %v417, %v418
          %420 = vadd.xlane.f32.xlu0 %v419
          %v421 = vpop.xlane.xlu0 %420
          %422 = vst.msk [vmem:[%s288] sm:$0xf] %vm411, %v421
        $region44: #{tpu_custom_call.1} parent=27 // pred_fallthru
          _
        %p423 = scmp.lt.s32.totalorder %s26, 0
        %s424 = scalar_select %p423, %s26, 0
        %s425 = smul.addr %s424, 4
        %s426 = scalar_lea.vmem %s2, %s425
        %p427 = scmp.lt.s32.totalorder %s26, 0
        %s428 = scalar_select %p427, %s26, 0
        %s429 = smul.addr %s428, 4
        %s430 = scalar_lea.vmem %s3, %s429
        // Predicated region
        $region45: #{tpu_custom_call.1} parent=27 // pred_check
          %p431 = pneg %p126
        $region46: #{tpu_custom_call.1} parent=27 // pred_check_branch
          %433 = sbr.rel (%p431) target = $region48
        $region47: #{tpu_custom_call.1} parent=27 // pred_region
          _
        $region48: #{tpu_custom_call.1} parent=27 // pred_fallthru
          _
        // Predicated region
        $region49: #{tpu_custom_call.1} parent=27 // pred_check
          %p434 = pneg %p152
        $region50: #{tpu_custom_call.1} parent=27 // pred_check_branch
          %436 = sbr.rel (%p434) target = $region52
        $region51: #{tpu_custom_call.1} parent=27 // pred_region
          _
        $region52: #{tpu_custom_call.1} parent=27 // pred_fallthru
          _
        // Predicated region
        $region53: #{tpu_custom_call.1} parent=27 // pred_check
          %p437 = pneg %p126
        $region54: #{tpu_custom_call.1} parent=27 // pred_check_branch
          %439 = sbr.rel (%p437) target = $region56
        $region55: #{tpu_custom_call.1} parent=27 // pred_region
          %p440 = scmp.lt.s32.totalorder %s26, 0
          %s441 = scalar_select %p440, %s26, 0
          %s442 = smul.addr %s441, 4
          %s443 = scalar_lea.vmem %s2, %s442
        $region56: #{tpu_custom_call.1} parent=27 // pred_fallthru
          _
        // Predicated region
        $region57: #{tpu_custom_call.1} parent=27 // pred_check
          %p444 = pneg %p152
        $region58: #{tpu_custom_call.1} parent=27 // pred_check_branch
          %446 = sbr.rel (%p444) target = $region60
        $region59: #{tpu_custom_call.1} parent=27 // pred_region
          %p447 = scmp.lt.s32.totalorder %s26, 0
          %s448 = scalar_select %p447, %s26, 0
          %s449 = smul.addr %s448, 4
          %s450 = scalar_lea.vmem %s3, %s449
        $region60: #{tpu_custom_call.1} parent=27 // pred_fallthru
          _
      $region28: #{tpu_custom_call.1} parent=5 // pred_fallthru
        _
      %p451 = scmp.le.s32.totalorder 2, %s16
      // Predicated region
      $region61: #{tpu_custom_call.1} parent=5 // pred_check
        %p452 = pneg %p451
      $region62: #{tpu_custom_call.1} parent=5 // pred_check_branch
        %454 = sbr.rel (%p452) target = $region64
      $region63: #{tpu_custom_call.1} parent=5 // pred_region
        %s455 = ssub.s32 %s16, 2
      $region64: #{tpu_custom_call.1} parent=5 // pred_fallthru
        _
    $region6: #{tpu_custom_call.1} parent=1 // loop_footer
      %s20 = sadd.s32 1, %s16
    $region7: #{tpu_custom_call.1} parent=1 // loop_footer_branch
      %15 = sbr.rel target = $region3
    $region8: #{tpu_custom_call.1} parent=1 // loop_exit
      _
    %456 = vsyncpa [#allocation5], 1
    %s457 = scalar_lea.sflag [#allocation5], 1
    %458 = vsyncpa %s457, 1
    %459 = vsyncpa [#allocation7], 1
    %s460 = scalar_lea.sflag [#allocation7], 1
    %461 = vsyncpa %s460, 1

</llo_original>
